<compile_context>
chip_gen: v6e
topology: v6e:2x2x1
jax: 0.10.0
libtpu: 0.0.40
codegen_flags: <defaults>
</compile_context>

<pallas_src>
import functools

import jax
import jax.numpy as jnp
from jax.experimental import pallas as pl
from jax.experimental.pallas import tpu as pltpu


def _basic_block_kernel(sigma_ref, x_ref, w1_ref, b1_ref, w2_ref, b2_ref,
                        wtau_ref, out_ref, xcol_ref, *, H, W, C, F):
    """One batch element per grid step.

    sigma_ref : (N,)        SMEM  per-batch sigma
    x_ref     : (1, C, HW)  VMEM  flattened NCHW image (HW on lanes)
    w1_ref    : (F, 9*C)    VMEM  conv1 weight, tap-major ((3dy+dx)*C + c)
    b1_ref    : (F, 1)      VMEM
    w2_ref    : (F, 9*F)    VMEM  conv2 weight with w3 (1x1) folded in
    b2_ref    : (F, 1)      VMEM  conv2 bias  with w3 (1x1) folded in
    wtau_ref  : (F, C)      VMEM  tau 1x1 conv (no bias), transposed
    out_ref   : (1, C, HW)  VMEM
    xcol_ref  : (9*C, HW)   VMEM scratch (im2col buffer, reused by both convs)
    """
    HW = H * W
    b = pl.program_id(0)
    s = sigma_ref[b]
    noise = 1.0 / (s * s)

    x = x_ref[0]                                    # (C, HW) f32

    # Column-validity masks. Row validity is handled by the zero-fill shifts.
    lane = jax.lax.broadcasted_iota(jnp.int32, (C, HW), 1)
    col = (lane & (W - 1)) if (W & (W - 1)) == 0 else (lane % W)
    mask_l = col >= 1          # tap reads column j-1
    mask_r = col <= W - 2      # tap reads column j+1

    def shift_zfill(v, off):
        # out[:, p] = v[:, p + off] if 0 <= p + off < HW else 0
        if off == 0:
            return v
        z = jnp.zeros((v.shape[0], abs(off)), v.dtype)
        if off > 0:
            return jnp.concatenate([v[:, off:], z], axis=1)
        return jnp.concatenate([z, v[:, :off]], axis=1)

    def fill_im2col(src):
        # xcol[(3*dy+dx)*C + c, i*W + j] = src_zeropad[c, i+dy-1, j+dx-1]
        for dy in range(3):
            for dx in range(3):
                t = shift_zfill(src, (dy - 1) * W + (dx - 1))
                if dx == 0:
                    t = jnp.where(mask_l, t, 0.0)
                elif dx == 2:
                    t = jnp.where(mask_r, t, 0.0)
                k = dy * 3 + dx
                xcol_ref[k * C:(k + 1) * C, :] = t

    # ---- conv1: 3x3, pad=1, bias, ReLU — a single K=9C matmul, (F,HW) out ----
    fill_im2col(x)
    acc1 = jnp.dot(w1_ref[...].astype(jnp.bfloat16),
                   xcol_ref[...].astype(jnp.bfloat16),
                   preferred_element_type=jnp.float32)
    h1 = jnp.maximum(acc1 + b1_ref[...], 0.0)       # (F, HW) f32

    # ---- conv2: 3x3, pad=1, bias, with the trailing 1x1 conv pre-folded ----
    fill_im2col(h1)
    body = jnp.dot(w2_ref[...].astype(jnp.bfloat16),
                   xcol_ref[...].astype(jnp.bfloat16),
                   preferred_element_type=jnp.float32) + b2_ref[...]

    # ---- tau((1/sigma^2) * x): 1x1 conv (f32); scale applied post-matmul ----
    tau = noise * jnp.dot(wtau_ref[...], x, preferred_element_type=jnp.float32)

    out_ref[0] = x - body - tau


def basic_block_forward(x_nchw, sigma, params):
    """Wrapper: takes PyTorch-layout NCHW x and (N,1,1,1) sigma."""
    N, C, H, W = x_nchw.shape
    F = params['w3'].shape[1]
    assert C == F, "BasicBlock uses feats channels throughout"
    HW = H * W

    x = x_nchw.reshape(N, C, HW).astype(jnp.float32)
    sig = sigma.reshape(N).astype(jnp.float32)

    w1 = params['w1'].astype(jnp.float32)      # (3,3,C,F) HWIO
    b1 = params['b1'].astype(jnp.float32)      # (1,F)
    w2 = params['w2'].astype(jnp.float32)      # (3,3,F,F)
    b2 = params['b2'].astype(jnp.float32)      # (1,F)
    w3 = params['w3'].astype(jnp.float32)      # (F,F)
    wtau = params['wtau'].astype(jnp.float32)  # (C,F)

    # Fold the body-tail 1x1 conv into conv2 (one-time, outside the kernel).
    w2f = jnp.einsum('hwif,fo->hwio', w2, w3)
    b2f = b2 @ w3                                           # (1, F)

    # Weight-stationary layouts: (out_ch, 9*in_ch), tap-major columns, so the
    # conv matmul result is (F, H*W) with the big spatial axis on lanes.
    w1k = jnp.transpose(w1, (3, 0, 1, 2)).reshape(F, 9 * C)
    w2k = jnp.transpose(w2f, (3, 0, 1, 2)).reshape(F, 9 * F)
    b1k = b1.reshape(F, 1)
    b2k = b2f.reshape(F, 1)
    wtau_t = wtau.T                                         # (F, C)

    kernel = functools.partial(_basic_block_kernel, H=H, W=W, C=C, F=F)
    out = pl.pallas_call(
        kernel,
        out_shape=jax.ShapeDtypeStruct((N, C, HW), jnp.float32),
        grid=(N,),
        in_specs=[
            pl.BlockSpec(memory_space=pltpu.SMEM),               # sigma
            pl.BlockSpec((1, C, HW), lambda b: (b, 0, 0)),       # x
            pl.BlockSpec((F, 9 * C), lambda b: (0, 0)),          # w1k
            pl.BlockSpec((F, 1), lambda b: (0, 0)),              # b1k
            pl.BlockSpec((F, 9 * F), lambda b: (0, 0)),          # w2k (folded)
            pl.BlockSpec((F, 1), lambda b: (0, 0)),              # b2k (folded)
            pl.BlockSpec((F, C), lambda b: (0, 0)),              # wtau^T
        ],
        out_specs=pl.BlockSpec((1, C, HW), lambda b: (b, 0, 0)),
        scratch_shapes=[pltpu.VMEM((9 * C, HW), jnp.float32)],
        compiler_params=pltpu.CompilerParams(
            dimension_semantics=("parallel",)),
    )(sig, x, w1k, b1k, w2k, b2k, wtau_t)

    return out.reshape(N, C, H, W)                           # back to NCHW


def ref_forward(x_nchw, sigma, p):
    """Pure-JAX f32 reference (same math, XLA convs) for verification."""
    x = jnp.transpose(x_nchw, (0, 2, 3, 1)).astype(jnp.float32)

    def conv3(h, w):
        return jax.lax.conv_general_dilated(
            h, w, window_strides=(1, 1), padding='SAME',
            dimension_numbers=('NHWC', 'HWIO', 'NHWC'))

    h = jax.nn.relu(conv3(x, p['w1']) + p['b1'])
    h = conv3(h, p['w2']) + p['b2']
    body = jnp.einsum('nhwc,cf->nhwf', h, p['w3'])
    noise = (1.0 / sigma.astype(jnp.float32) ** 2).reshape(-1, 1, 1, 1)
    tau = jnp.einsum('nhwc,cf->nhwf', noise * x, p['wtau'])
    out = x - body - tau
    return jnp.transpose(out, (0, 3, 1, 2))


if __name__ == "__main__":
    key = jax.random.PRNGKey(0)
    N, feats, H, W = 2, 8, 16, 16
    ks = jax.random.split(key, 8)

    x_nchw = jax.random.normal(ks[0], (N, feats, H, W), jnp.float32)
    sigma = jax.random.uniform(ks[1], (N, 1, 1, 1), jnp.float32,
                               minval=0.5, maxval=2.0)

    params = {
        'w1': 0.1 * jax.random.normal(ks[2], (3, 3, feats, feats), jnp.float32),
        'b1': 0.1 * jax.random.normal(ks[3], (1, feats), jnp.float32),
        'w2': 0.1 * jax.random.normal(ks[4], (3, 3, feats, feats), jnp.float32),
        'b2': 0.1 * jax.random.normal(ks[5], (1, feats), jnp.float32),
        'w3': 0.1 * jax.random.normal(ks[6], (feats, feats), jnp.float32),
        'wtau': 0.1 * jax.random.normal(ks[7], (feats, feats), jnp.float32),
    }

    out = basic_block_forward(x_nchw, sigma, params)
    out = jax.block_until_ready(out)

    ref = ref_forward(x_nchw, sigma, params)
    err = float(jnp.max(jnp.abs(out - ref)))
    # Tolerance loosened vs the pure-f32 version: conv matmul operands are
    # bf16 (f32 accumulation), expected max abs error ~1e-2 at these scales.
    assert jnp.allclose(out, ref, atol=5e-2, rtol=5e-2), f"max abs err {err}"

    print("KERNEL_OK")
</pallas_src>

<mosaic_0001>
module attributes {stable_mosaic.version = 11 : i64} {
  func.func @_basic_block_kernel(%arg0: i32, %arg1: memref<2xf32, #tpu.memory_space<smem>>, %arg2: memref<1x8x256xf32, #tpu.memory_space<vmem>>, %arg3: memref<8x72xf32, #tpu.memory_space<vmem>>, %arg4: memref<8x1xf32, #tpu.memory_space<vmem>>, %arg5: memref<8x72xf32, #tpu.memory_space<vmem>>, %arg6: memref<8x1xf32, #tpu.memory_space<vmem>>, %arg7: memref<8x8xf32, #tpu.memory_space<vmem>>, %arg8: memref<1x8x256xf32, #tpu.memory_space<vmem>>, %arg9: memref<72x256xf32, #tpu.memory_space<vmem>>) attributes {dimension_semantics = [#tpu.dimension_semantics<parallel>], iteration_bounds = array<i64: 2>, scalar_prefetch = 0 : i64, scratch_operands = 1 : i64, tpu.core_type = #tpu.core_type<tc>, window_params = [{transform_indices = @transform_0, window_bounds = array<i64: 2>}, {transform_indices = @transform_1, window_bounds = array<i64: 1, 8, 256>}, {pipeline_mode = #tpu.pipeline_mode<synchronous>, transform_indices = @transform_2, window_bounds = array<i64: 8, 72>}, {pipeline_mode = #tpu.pipeline_mode<synchronous>, transform_indices = @transform_3, window_bounds = array<i64: 8, 1>}, {pipeline_mode = #tpu.pipeline_mode<synchronous>, transform_indices = @transform_4, window_bounds = array<i64: 8, 72>}, {pipeline_mode = #tpu.pipeline_mode<synchronous>, transform_indices = @transform_5, window_bounds = array<i64: 8, 1>}, {pipeline_mode = #tpu.pipeline_mode<synchronous>, transform_indices = @transform_6, window_bounds = array<i64: 8, 8>}, {transform_indices = @transform_7, window_bounds = array<i64: 1, 8, 256>}]} {
    %0 = arith.index_cast %arg0 : i32 to index
    %1 = memref.load %arg1[%0] : memref<2xf32, #tpu.memory_space<smem>>
    %2 = arith.mulf %1, %1 : f32
    %cst = arith.constant 1.000000e+00 : f32
    %3 = arith.divf %cst, %2 : f32
    %c0 = arith.constant 0 : index
    %c0_0 = arith.constant 0 : index
    %c0_1 = arith.constant 0 : index
    %4 = vector.load %arg2[%c0, %c0_0, %c0_1] : memref<1x8x256xf32, #tpu.memory_space<vmem>>, vector<1x8x256xf32>
    %5 = vector.shape_cast %4 : vector<1x8x256xf32> to vector<8x256xf32>
    %6 = tpu.iota {dimensions = array<i32: 1>} : vector<8x256xi32>
    %c15_i32 = arith.constant 15 : i32
    %7 = vector.broadcast %c15_i32 : i32 to vector<8x256xi32>
    %8 = arith.andi %6, %7 : vector<8x256xi32>
    %c1_i32 = arith.constant 1 : i32
    %9 = vector.broadcast %c1_i32 : i32 to vector<8x256xi32>
    %10 = arith.cmpi sge, %8, %9 : vector<8x256xi32>
    %c14_i32 = arith.constant 14 : i32
    %11 = vector.broadcast %c14_i32 : i32 to vector<8x256xi32>
    %12 = arith.cmpi sle, %8, %11 : vector<8x256xi32>
    %cst_2 = arith.constant 0.000000e+00 : f32
    %13 = vector.broadcast %cst_2 : f32 to vector<8x17xf32>
    %14 = vector.extract_strided_slice %5 {offsets = [0, 0], sizes = [8, 239], strides = [1, 1]} : vector<8x256xf32> to vector<8x239xf32>
    %15 = tpu.concatenate %13, %14 in 1 : vector<8x17xf32>, vector<8x239xf32> -> vector<8x256xf32>
    %cst_3 = arith.constant 0.000000e+00 : f32
    %16 = vector.broadcast %cst_3 : f32 to vector<8x256xf32>
    %17 = arith.select %10, %15, %16 : vector<8x256xi1>, vector<8x256xf32>
    %c0_4 = arith.constant 0 : index
    %c0_5 = arith.constant 0 : index
    %18 = vector.load %arg9[%c0_4, %c0_5] : memref<72x256xf32, #tpu.memory_space<vmem>>, vector<8x256xf32>
    tpu.vector_store %arg9[%c0_4, %c0_5], %17 {strides = array<i32>} : memref<72x256xf32, #tpu.memory_space<vmem>>, vector<8x256xf32>,
    %cst_6 = arith.constant 0.000000e+00 : f32
    %19 = vector.broadcast %cst_6 : f32 to vector<8x16xf32>
    %20 = vector.extract_strided_slice %5 {offsets = [0, 0], sizes = [8, 240], strides = [1, 1]} : vector<8x256xf32> to vector<8x240xf32>
    %21 = tpu.concatenate %19, %20 in 1 : vector<8x16xf32>, vector<8x240xf32> -> vector<8x256xf32>
    %c8 = arith.constant 8 : index
    %c0_7 = arith.constant 0 : index
    %22 = vector.load %arg9[%c8, %c0_7] : memref<72x256xf32, #tpu.memory_space<vmem>>, vector<8x256xf32>
    tpu.vector_store %arg9[%c8, %c0_7], %21 {strides = array<i32>} : memref<72x256xf32, #tpu.memory_space<vmem>>, vector<8x256xf32>,
    %cst_8 = arith.constant 0.000000e+00 : f32
    %23 = vector.broadcast %cst_8 : f32 to vector<8x15xf32>
    %24 = vector.extract_strided_slice %5 {offsets = [0, 0], sizes = [8, 241], strides = [1, 1]} : vector<8x256xf32> to vector<8x241xf32>
    %25 = tpu.concatenate %23, %24 in 1 : vector<8x15xf32>, vector<8x241xf32> -> vector<8x256xf32>
    %cst_9 = arith.constant 0.000000e+00 : f32
    %26 = vector.broadcast %cst_9 : f32 to vector<8x256xf32>
    %27 = arith.select %12, %25, %26 : vector<8x256xi1>, vector<8x256xf32>
    %c16 = arith.constant 16 : index
    %c0_10 = arith.constant 0 : index
    %28 = vector.load %arg9[%c16, %c0_10] : memref<72x256xf32, #tpu.memory_space<vmem>>, vector<8x256xf32>
    tpu.vector_store %arg9[%c16, %c0_10], %27 {strides = array<i32>} : memref<72x256xf32, #tpu.memory_space<vmem>>, vector<8x256xf32>,
    %cst_11 = arith.constant 0.000000e+00 : f32
    %29 = vector.broadcast %cst_11 : f32 to vector<8x1xf32>
    %30 = vector.extract_strided_slice %5 {offsets = [0, 0], sizes = [8, 255], strides = [1, 1]} : vector<8x256xf32> to vector<8x255xf32>
    %31 = tpu.concatenate %29, %30 in 1 : vector<8x1xf32>, vector<8x255xf32> -> vector<8x256xf32>
    %cst_12 = arith.constant 0.000000e+00 : f32
    %32 = vector.broadcast %cst_12 : f32 to vector<8x256xf32>
    %33 = arith.select %10, %31, %32 : vector<8x256xi1>, vector<8x256xf32>
    %c24 = arith.constant 24 : index
    %c0_13 = arith.constant 0 : index
    %34 = vector.load %arg9[%c24, %c0_13] : memref<72x256xf32, #tpu.memory_space<vmem>>, vector<8x256xf32>
    tpu.vector_store %arg9[%c24, %c0_13], %33 {strides = array<i32>} : memref<72x256xf32, #tpu.memory_space<vmem>>, vector<8x256xf32>,
    %c32 = arith.constant 32 : index
    %c0_14 = arith.constant 0 : index
    %35 = vector.load %arg9[%c32, %c0_14] : memref<72x256xf32, #tpu.memory_space<vmem>>, vector<8x256xf32>
    tpu.vector_store %arg9[%c32, %c0_14], %5 {strides = array<i32>} : memref<72x256xf32, #tpu.memory_space<vmem>>, vector<8x256xf32>,
    %cst_15 = arith.constant 0.000000e+00 : f32
    %36 = vector.broadcast %cst_15 : f32 to vector<8x1xf32>
    %37 = vector.extract_strided_slice %5 {offsets = [0, 1], sizes = [8, 255], strides = [1, 1]} : vector<8x256xf32> to vector<8x255xf32>
    %38 = tpu.concatenate %37, %36 in 1 : vector<8x255xf32>, vector<8x1xf32> -> vector<8x256xf32>
    %cst_16 = arith.constant 0.000000e+00 : f32
    %39 = vector.broadcast %cst_16 : f32 to vector<8x256xf32>
    %40 = arith.select %12, %38, %39 : vector<8x256xi1>, vector<8x256xf32>
    %c40 = arith.constant 40 : index
    %c0_17 = arith.constant 0 : index
    %41 = vector.load %arg9[%c40, %c0_17] : memref<72x256xf32, #tpu.memory_space<vmem>>, vector<8x256xf32>
    tpu.vector_store %arg9[%c40, %c0_17], %40 {strides = array<i32>} : memref<72x256xf32, #tpu.memory_space<vmem>>, vector<8x256xf32>,
    %cst_18 = arith.constant 0.000000e+00 : f32
    %42 = vector.broadcast %cst_18 : f32 to vector<8x15xf32>
    %43 = vector.extract_strided_slice %5 {offsets = [0, 15], sizes = [8, 241], strides = [1, 1]} : vector<8x256xf32> to vector<8x241xf32>
    %44 = tpu.concatenate %43, %42 in 1 : vector<8x241xf32>, vector<8x15xf32> -> vector<8x256xf32>
    %cst_19 = arith.constant 0.000000e+00 : f32
    %45 = vector.broadcast %cst_19 : f32 to vector<8x256xf32>
    %46 = arith.select %10, %44, %45 : vector<8x256xi1>, vector<8x256xf32>
    %c48 = arith.constant 48 : index
    %c0_20 = arith.constant 0 : index
    %47 = vector.load %arg9[%c48, %c0_20] : memref<72x256xf32, #tpu.memory_space<vmem>>, vector<8x256xf32>
    tpu.vector_store %arg9[%c48, %c0_20], %46 {strides = array<i32>} : memref<72x256xf32, #tpu.memory_space<vmem>>, vector<8x256xf32>,
    %cst_21 = arith.constant 0.000000e+00 : f32
    %48 = vector.broadcast %cst_21 : f32 to vector<8x16xf32>
    %49 = vector.extract_strided_slice %5 {offsets = [0, 16], sizes = [8, 240], strides = [1, 1]} : vector<8x256xf32> to vector<8x240xf32>
    %50 = tpu.concatenate %49, %48 in 1 : vector<8x240xf32>, vector<8x16xf32> -> vector<8x256xf32>
    %c56 = arith.constant 56 : index
    %c0_22 = arith.constant 0 : index
    %51 = vector.load %arg9[%c56, %c0_22] : memref<72x256xf32, #tpu.memory_space<vmem>>, vector<8x256xf32>
    tpu.vector_store %arg9[%c56, %c0_22], %50 {strides = array<i32>} : memref<72x256xf32, #tpu.memory_space<vmem>>, vector<8x256xf32>,
    %cst_23 = arith.constant 0.000000e+00 : f32
    %52 = vector.broadcast %cst_23 : f32 to vector<8x17xf32>
    %53 = vector.extract_strided_slice %5 {offsets = [0, 17], sizes = [8, 239], strides = [1, 1]} : vector<8x256xf32> to vector<8x239xf32>
    %54 = tpu.concatenate %53, %52 in 1 : vector<8x239xf32>, vector<8x17xf32> -> vector<8x256xf32>
    %cst_24 = arith.constant 0.000000e+00 : f32
    %55 = vector.broadcast %cst_24 : f32 to vector<8x256xf32>
    %56 = arith.select %12, %54, %55 : vector<8x256xi1>, vector<8x256xf32>
    %c64 = arith.constant 64 : index
    %c0_25 = arith.constant 0 : index
    %57 = vector.load %arg9[%c64, %c0_25] : memref<72x256xf32, #tpu.memory_space<vmem>>, vector<8x256xf32>
    tpu.vector_store %arg9[%c64, %c0_25], %56 {strides = array<i32>} : memref<72x256xf32, #tpu.memory_space<vmem>>, vector<8x256xf32>,
    %c0_26 = arith.constant 0 : index
    %c0_27 = arith.constant 0 : index
    %58 = vector.load %arg3[%c0_26, %c0_27] : memref<8x72xf32, #tpu.memory_space<vmem>>, vector<8x72xf32>
    %59 = arith.truncf %58 : vector<8x72xf32> to vector<8x72xbf16>
    %c0_28 = arith.constant 0 : index
    %c0_29 = arith.constant 0 : index
    %60 = vector.load %arg9[%c0_28, %c0_29] : memref<72x256xf32, #tpu.memory_space<vmem>>, vector<72x256xf32>
    %61 = arith.truncf %60 : vector<72x256xf32> to vector<72x256xbf16>
    %cst_30 = arith.constant dense<0.000000e+00> : vector<8x256xf32>
    %62 = tpu.matmul %59, %61, %cst_30 {dimension_numbers = #tpu.dot_dimension_numbers<[1], [0], [0], [1], [0, 0, 1, 1], [], []>} : vector<8x72xbf16>, vector<72x256xbf16>, vector<8x256xf32> -> vector<8x256xf32>
    %c0_31 = arith.constant 0 : index
    %c0_32 = arith.constant 0 : index
    %63 = vector.load %arg4[%c0_31, %c0_32] : memref<8x1xf32, #tpu.memory_space<vmem>>, vector<8x1xf32>
    %64 = vector.broadcast %63 : vector<8x1xf32> to vector<8x256xf32>
    %65 = arith.addf %62, %64 : vector<8x256xf32>
    %cst_33 = arith.constant 0.000000e+00 : f32
    %66 = vector.broadcast %cst_33 : f32 to vector<8x256xf32>
    %67 = arith.maximumf %65, %66 : vector<8x256xf32>
    %cst_34 = arith.constant 0.000000e+00 : f32
    %68 = vector.broadcast %cst_34 : f32 to vector<8x17xf32>
    %69 = vector.extract_strided_slice %67 {offsets = [0, 0], sizes = [8, 239], strides = [1, 1]} : vector<8x256xf32> to vector<8x239xf32>
    %70 = tpu.concatenate %68, %69 in 1 : vector<8x17xf32>, vector<8x239xf32> -> vector<8x256xf32>
    %cst_35 = arith.constant 0.000000e+00 : f32
    %71 = vector.broadcast %cst_35 : f32 to vector<8x256xf32>
    %72 = arith.select %10, %70, %71 : vector<8x256xi1>, vector<8x256xf32>
    %c0_36 = arith.constant 0 : index
    %c0_37 = arith.constant 0 : index
    %73 = vector.load %arg9[%c0_36, %c0_37] : memref<72x256xf32, #tpu.memory_space<vmem>>, vector<8x256xf32>
    tpu.vector_store %arg9[%c0_36, %c0_37], %72 {strides = array<i32>} : memref<72x256xf32, #tpu.memory_space<vmem>>, vector<8x256xf32>,
    %cst_38 = arith.constant 0.000000e+00 : f32
    %74 = vector.broadcast %cst_38 : f32 to vector<8x16xf32>
    %75 = vector.extract_strided_slice %67 {offsets = [0, 0], sizes = [8, 240], strides = [1, 1]} : vector<8x256xf32> to vector<8x240xf32>
    %76 = tpu.concatenate %74, %75 in 1 : vector<8x16xf32>, vector<8x240xf32> -> vector<8x256xf32>
    %c8_39 = arith.constant 8 : index
    %c0_40 = arith.constant 0 : index
    %77 = vector.load %arg9[%c8_39, %c0_40] : memref<72x256xf32, #tpu.memory_space<vmem>>, vector<8x256xf32>
    tpu.vector_store %arg9[%c8_39, %c0_40], %76 {strides = array<i32>} : memref<72x256xf32, #tpu.memory_space<vmem>>, vector<8x256xf32>,
    %cst_41 = arith.constant 0.000000e+00 : f32
    %78 = vector.broadcast %cst_41 : f32 to vector<8x15xf32>
    %79 = vector.extract_strided_slice %67 {offsets = [0, 0], sizes = [8, 241], strides = [1, 1]} : vector<8x256xf32> to vector<8x241xf32>
    %80 = tpu.concatenate %78, %79 in 1 : vector<8x15xf32>, vector<8x241xf32> -> vector<8x256xf32>
    %cst_42 = arith.constant 0.000000e+00 : f32
    %81 = vector.broadcast %cst_42 : f32 to vector<8x256xf32>
    %82 = arith.select %12, %80, %81 : vector<8x256xi1>, vector<8x256xf32>
    %c16_43 = arith.constant 16 : index
    %c0_44 = arith.constant 0 : index
    %83 = vector.load %arg9[%c16_43, %c0_44] : memref<72x256xf32, #tpu.memory_space<vmem>>, vector<8x256xf32>
    tpu.vector_store %arg9[%c16_43, %c0_44], %82 {strides = array<i32>} : memref<72x256xf32, #tpu.memory_space<vmem>>, vector<8x256xf32>,
    %cst_45 = arith.constant 0.000000e+00 : f32
    %84 = vector.broadcast %cst_45 : f32 to vector<8x1xf32>
    %85 = vector.extract_strided_slice %67 {offsets = [0, 0], sizes = [8, 255], strides = [1, 1]} : vector<8x256xf32> to vector<8x255xf32>
    %86 = tpu.concatenate %84, %85 in 1 : vector<8x1xf32>, vector<8x255xf32> -> vector<8x256xf32>
    %cst_46 = arith.constant 0.000000e+00 : f32
    %87 = vector.broadcast %cst_46 : f32 to vector<8x256xf32>
    %88 = arith.select %10, %86, %87 : vector<8x256xi1>, vector<8x256xf32>
    %c24_47 = arith.constant 24 : index
    %c0_48 = arith.constant 0 : index
    %89 = vector.load %arg9[%c24_47, %c0_48] : memref<72x256xf32, #tpu.memory_space<vmem>>, vector<8x256xf32>
    tpu.vector_store %arg9[%c24_47, %c0_48], %88 {strides = array<i32>} : memref<72x256xf32, #tpu.memory_space<vmem>>, vector<8x256xf32>,
    %c32_49 = arith.constant 32 : index
    %c0_50 = arith.constant 0 : index
    %90 = vector.load %arg9[%c32_49, %c0_50] : memref<72x256xf32, #tpu.memory_space<vmem>>, vector<8x256xf32>
    tpu.vector_store %arg9[%c32_49, %c0_50], %67 {strides = array<i32>} : memref<72x256xf32, #tpu.memory_space<vmem>>, vector<8x256xf32>,
    %cst_51 = arith.constant 0.000000e+00 : f32
    %91 = vector.broadcast %cst_51 : f32 to vector<8x1xf32>
    %92 = vector.extract_strided_slice %67 {offsets = [0, 1], sizes = [8, 255], strides = [1, 1]} : vector<8x256xf32> to vector<8x255xf32>
    %93 = tpu.concatenate %92, %91 in 1 : vector<8x255xf32>, vector<8x1xf32> -> vector<8x256xf32>
    %cst_52 = arith.constant 0.000000e+00 : f32
    %94 = vector.broadcast %cst_52 : f32 to vector<8x256xf32>
    %95 = arith.select %12, %93, %94 : vector<8x256xi1>, vector<8x256xf32>
    %c40_53 = arith.constant 40 : index
    %c0_54 = arith.constant 0 : index
    %96 = vector.load %arg9[%c40_53, %c0_54] : memref<72x256xf32, #tpu.memory_space<vmem>>, vector<8x256xf32>
    tpu.vector_store %arg9[%c40_53, %c0_54], %95 {strides = array<i32>} : memref<72x256xf32, #tpu.memory_space<vmem>>, vector<8x256xf32>,
    %cst_55 = arith.constant 0.000000e+00 : f32
    %97 = vector.broadcast %cst_55 : f32 to vector<8x15xf32>
    %98 = vector.extract_strided_slice %67 {offsets = [0, 15], sizes = [8, 241], strides = [1, 1]} : vector<8x256xf32> to vector<8x241xf32>
    %99 = tpu.concatenate %98, %97 in 1 : vector<8x241xf32>, vector<8x15xf32> -> vector<8x256xf32>
    %cst_56 = arith.constant 0.000000e+00 : f32
    %100 = vector.broadcast %cst_56 : f32 to vector<8x256xf32>
    %101 = arith.select %10, %99, %100 : vector<8x256xi1>, vector<8x256xf32>
    %c48_57 = arith.constant 48 : index
    %c0_58 = arith.constant 0 : index
    %102 = vector.load %arg9[%c48_57, %c0_58] : memref<72x256xf32, #tpu.memory_space<vmem>>, vector<8x256xf32>
    tpu.vector_store %arg9[%c48_57, %c0_58], %101 {strides = array<i32>} : memref<72x256xf32, #tpu.memory_space<vmem>>, vector<8x256xf32>,
    %cst_59 = arith.constant 0.000000e+00 : f32
    %103 = vector.broadcast %cst_59 : f32 to vector<8x16xf32>
    %104 = vector.extract_strided_slice %67 {offsets = [0, 16], sizes = [8, 240], strides = [1, 1]} : vector<8x256xf32> to vector<8x240xf32>
    %105 = tpu.concatenate %104, %103 in 1 : vector<8x240xf32>, vector<8x16xf32> -> vector<8x256xf32>
    %c56_60 = arith.constant 56 : index
    %c0_61 = arith.constant 0 : index
    %106 = vector.load %arg9[%c56_60, %c0_61] : memref<72x256xf32, #tpu.memory_space<vmem>>, vector<8x256xf32>
    tpu.vector_store %arg9[%c56_60, %c0_61], %105 {strides = array<i32>} : memref<72x256xf32, #tpu.memory_space<vmem>>, vector<8x256xf32>,
    %cst_62 = arith.constant 0.000000e+00 : f32
    %107 = vector.broadcast %cst_62 : f32 to vector<8x17xf32>
    %108 = vector.extract_strided_slice %67 {offsets = [0, 17], sizes = [8, 239], strides = [1, 1]} : vector<8x256xf32> to vector<8x239xf32>
    %109 = tpu.concatenate %108, %107 in 1 : vector<8x239xf32>, vector<8x17xf32> -> vector<8x256xf32>
    %cst_63 = arith.constant 0.000000e+00 : f32
    %110 = vector.broadcast %cst_63 : f32 to vector<8x256xf32>
    %111 = arith.select %12, %109, %110 : vector<8x256xi1>, vector<8x256xf32>
    %c64_64 = arith.constant 64 : index
    %c0_65 = arith.constant 0 : index
    %112 = vector.load %arg9[%c64_64, %c0_65] : memref<72x256xf32, #tpu.memory_space<vmem>>, vector<8x256xf32>
    tpu.vector_store %arg9[%c64_64, %c0_65], %111 {strides = array<i32>} : memref<72x256xf32, #tpu.memory_space<vmem>>, vector<8x256xf32>,
    %c0_66 = arith.constant 0 : index
    %c0_67 = arith.constant 0 : index
    %113 = vector.load %arg5[%c0_66, %c0_67] : memref<8x72xf32, #tpu.memory_space<vmem>>, vector<8x72xf32>
    %114 = arith.truncf %113 : vector<8x72xf32> to vector<8x72xbf16>
    %c0_68 = arith.constant 0 : index
    %c0_69 = arith.constant 0 : index
    %115 = vector.load %arg9[%c0_68, %c0_69] : memref<72x256xf32, #tpu.memory_space<vmem>>, vector<72x256xf32>
    %116 = arith.truncf %115 : vector<72x256xf32> to vector<72x256xbf16>
    %cst_70 = arith.constant dense<0.000000e+00> : vector<8x256xf32>
    %117 = tpu.matmul %114, %116, %cst_70 {dimension_numbers = #tpu.dot_dimension_numbers<[1], [0], [0], [1], [0, 0, 1, 1], [], []>} : vector<8x72xbf16>, vector<72x256xbf16>, vector<8x256xf32> -> vector<8x256xf32>
    %c0_71 = arith.constant 0 : index
    %c0_72 = arith.constant 0 : index
    %118 = vector.load %arg6[%c0_71, %c0_72] : memref<8x1xf32, #tpu.memory_space<vmem>>, vector<8x1xf32>
    %119 = vector.broadcast %118 : vector<8x1xf32> to vector<8x256xf32>
    %120 = arith.addf %117, %119 : vector<8x256xf32>
    %c0_73 = arith.constant 0 : index
    %c0_74 = arith.constant 0 : index
    %121 = vector.load %arg7[%c0_73, %c0_74] : memref<8x8xf32, #tpu.memory_space<vmem>>, vector<8x8xf32>
    %cst_75 = arith.constant dense<0.000000e+00> : vector<8x256xf32>
    %122 = tpu.matmul %121, %5, %cst_75 {dimension_numbers = #tpu.dot_dimension_numbers<[1], [0], [0], [1], [0, 0, 1, 1], [], []>} : vector<8x8xf32>, vector<8x256xf32>, vector<8x256xf32> -> vector<8x256xf32>
    %123 = vector.broadcast %3 : f32 to vector<8x256xf32>
    %124 = arith.mulf %123, %122 : vector<8x256xf32>
    %125 = arith.subf %5, %120 : vector<8x256xf32>
    %126 = arith.subf %125, %124 : vector<8x256xf32>
    %c0_76 = arith.constant 0 : index
    %c0_77 = arith.constant 0 : index
    %c0_78 = arith.constant 0 : index
    %127 = vector.load %arg8[%c0_76, %c0_77, %c0_78] : memref<1x8x256xf32, #tpu.memory_space<vmem>>, vector<1x8x256xf32>
    %128 = vector.shape_cast %127 : vector<1x8x256xf32> to vector<8x256xf32>
    %129 = vector.shape_cast %126 : vector<8x256xf32> to vector<1x8x256xf32>
    tpu.vector_store %arg8[%c0_76, %c0_77, %c0_78], %129 {strides = array<i32>} : memref<1x8x256xf32, #tpu.memory_space<vmem>>, vector<1x8x256xf32>,
    return
  }
  func.func @transform_0(%arg0: i32) -> i32 {
    %c0_i32 = arith.constant 0 : i32
    %c0_i32_0 = arith.constant 0 : i32
    return %c0_i32 : i32
  }
  func.func @transform_1(%arg0: i32) -> (i32, i32, i32) {
    %c0_i32 = arith.constant 0 : i32
    %c0_i32_0 = arith.constant 0 : i32
    %c0_i32_1 = arith.constant 0 : i32
    return %arg0, %c0_i32, %c0_i32_0 : i32, i32, i32
  }
  func.func @transform_2(%arg0: i32) -> (i32, i32) {
    %c0_i32 = arith.constant 0 : i32
    %c0_i32_0 = arith.constant 0 : i32
    %c0_i32_1 = arith.constant 0 : i32
    return %c0_i32, %c0_i32_0 : i32, i32
  }
  func.func @transform_3(%arg0: i32) -> (i32, i32) {
    %c0_i32 = arith.constant 0 : i32
    %c0_i32_0 = arith.constant 0 : i32
    %c0_i32_1 = arith.constant 0 : i32
    return %c0_i32, %c0_i32_0 : i32, i32
  }
  func.func @transform_4(%arg0: i32) -> (i32, i32) {
    %c0_i32 = arith.constant 0 : i32
    %c0_i32_0 = arith.constant 0 : i32
    %c0_i32_1 = arith.constant 0 : i32
    return %c0_i32, %c0_i32_0 : i32, i32
  }
  func.func @transform_5(%arg0: i32) -> (i32, i32) {
    %c0_i32 = arith.constant 0 : i32
    %c0_i32_0 = arith.constant 0 : i32
    %c0_i32_1 = arith.constant 0 : i32
    return %c0_i32, %c0_i32_0 : i32, i32
  }
  func.func @transform_6(%arg0: i32) -> (i32, i32) {
    %c0_i32 = arith.constant 0 : i32
    %c0_i32_0 = arith.constant 0 : i32
    %c0_i32_1 = arith.constant 0 : i32
    return %c0_i32, %c0_i32_0 : i32, i32
  }
  func.func @transform_7(%arg0: i32) -> (i32, i32, i32) {
    %c0_i32 = arith.constant 0 : i32
    %c0_i32_0 = arith.constant 0 : i32
    %c0_i32_1 = arith.constant 0 : i32
    return %arg0, %c0_i32, %c0_i32_0 : i32, i32, i32
  }
}

</mosaic_0001>

<llo_original>
// kernel: tpu_custom_call.1
$region0: #{tpu_custom_call.1}
  #allocation0 [shape = 'u32[]', space=smem, size = 0x4, offset = 0x4, fixed_abs, tag = 'smem constant byte address 0x4 - core index']
  #allocation1 [shape = 'u32[144,128]{1,0:T(1,128)}', space=vmem, size = 0x12000, scoped, tag = 'internal scratch']
  #allocation2 [shape = 'f32[72,256]{1,0:T(8,128)}', space=vmem, size = 0x12000, scoped, tag = 'scratch operand']
  %s0 = inlined_call_operand.hbm [shape: f32[2], index: 0, kind: input, shape index: {}]
  %s1 = inlined_call_operand.hbm [shape: f32[2,8,256], index: 1, kind: input, shape index: {}]
  %s2 = inlined_call_operand.vmem [shape: f32[8,72], index: 2, kind: input, shape index: {}]
  %s3 = inlined_call_operand.vmem [shape: f32[8,1], index: 3, kind: input, shape index: {}]
  %s4 = inlined_call_operand.vmem [shape: f32[8,72], index: 4, kind: input, shape index: {}]
  %s5 = inlined_call_operand.vmem [shape: f32[8,1], index: 5, kind: input, shape index: {}]
  %s6 = inlined_call_operand.vmem [shape: f32[8,8], index: 6, kind: input, shape index: {}]
  %s7 = inlined_call_operand.hbm [shape: f32[2,8,256], index: 7, kind: output, shape index: {}]
  %s8 = sld [smem:[#allocation0]]
  $region69: #{tpu_custom_call.1} parent=0
    _
  %s10 = ssub.s32 1, %s8
  %s11 = scalar_select 0, %s10, %s8
  $region1: #{tpu_custom_call.1} parent=0
    #allocation3 [shape = 'u8[512]{0}', space=smem, size = 0x200, scoped, tag = 'input window, operand 0, single buffered']
    #allocation4 [shape = 's32[2]{0}', space=sflag, size = 0x8, scoped, tag = 'scoped memory for tpu_custom_call.1']
    #allocation5 [shape = 's32[2]{0}', space=sflag, size = 0x8, scoped, tag = 'scoped memory for tpu_custom_call.1']
    #allocation6 [shape = 's32[2]{0}', space=sflag, size = 0x8, scoped, tag = 'scoped memory for tpu_custom_call.1']
    #allocation7 [shape = 'u8[16384]{0}', space=vmem, size = 0x4000, scoped, tag = 'input window, operand 1']
    #allocation8 [shape = 'u8[16384]{0}', space=vmem, size = 0x4000, scoped, tag = 'output window, operand 0']
    %12 = vsyncpa [#allocation6], 0
    %13 = vsyncpa [#allocation4], 0
    %s14 = scalar_lea.sflag [#allocation4], 1
    %15 = vsyncpa %s14, 0
    %16 = vsyncpa [#allocation5], 0
    %s17 = scalar_lea.sflag [#allocation5], 1
    %18 = vsyncpa %s17, 0
    loop: start=0, step=1, limit=4
    $region2: #{tpu_custom_call.1} parent=1 // loop_pre_header
      _
    $region3: #{tpu_custom_call.1} parent=1 // loop_header
      %s20 = sphi 0, %s24
      %p21 = scmp.ge.s32.totalorder %s20, 4
      %s28 = sphi 0, %s28
      %s30 = sphi 0, %s28
      %s31 = sphi 0, %s30
      %s45 = sphi 0, %s31
      %s51 = sphi 0, %s53
      %s54 = sphi 0, %s51
      %s55 = sphi 0, %s54
      %s71 = sphi 0, %s55
      %s75 = sphi 0, %s75
      %s77 = sphi 0, %s75
      %s78 = sphi 0, %s77
      %s92 = sphi 0, %s78
      %s96 = sphi 0, %s96
      %s98 = sphi 0, %s96
      %s99 = sphi 0, %s98
      %s113 = sphi 0, %s99
      %s117 = sphi 0, %s117
      %s119 = sphi 0, %s117
      %s120 = sphi 0, %s119
      %s134 = sphi 0, %s120
      %s138 = sphi 0, %s138
      %s140 = sphi 0, %s138
      %s141 = sphi 0, %s140
      %s155 = sphi 0, %s141
      %s159 = sphi 0, %s159
      %s161 = sphi 0, %s159
      %s162 = sphi 0, %s161
      %s176 = sphi 0, %s162
      %s182 = sphi 0, %s184
      %s185 = sphi 0, %s182
      %s186 = sphi 0, %s185
      %s202 = sphi 0, %s186
    $region4: #{tpu_custom_call.1} parent=1 // loop_header_branch
      %23 = sbr.rel (%p21) target = $region8
    $region5: #{tpu_custom_call.1} parent=1 // loop_body
      %s25 = ssub.s32 %s20, 1
      %s26 = ssub.s32 %s20, 2
      %s27 = sadd.s32 %s20, 1
      %s29 = sadd.s32 %s28, 1
      %p32 = scmp.eq.s32.totalorder %s20, 1
      %p33 = scmp.ne.s32.totalorder %s28, %s30
      %p34 = scmp.eq.s32.totalorder %s20, 0
      %p35 = por %p33, %p34
      %p36 = scmp.ne.s32.totalorder %s28, %s30
      %p37 = scmp.eq.s32.totalorder %s25, 1
      %p38 = por %p36, %p37
      %p39 = scmp.ne.s32.totalorder %s30, %s31
      %p40 = scmp.eq.s32.totalorder %s25, 0
      %p41 = por %p39, %p40
      %p42 = scmp.ne.s32.totalorder %s30, %s31
      %p43 = scmp.eq.s32.totalorder %s26, 1
      %p44 = por %p42, %p43
      %p46 = scmp.ne.s32.totalorder %s31, %s45
      %p47 = scmp.eq.s32.totalorder %s26, 0
      %p48 = por %p46, %p47
      %s49 = ssub.s32 %s20, %s27
      %p50 = scmp.eq.s32.totalorder %s49, 0
      %s52 = sadd.s32 %s51, 1
      %s53 = scalar_select %p50, %s51, %s52
      %p56 = pneg %p50
      %p57 = scmp.eq.s32.totalorder %s20, 1
      %p58 = por %p56, %p57
      %p59 = scmp.ne.s32.totalorder %s51, %s54
      %p60 = scmp.eq.s32.totalorder %s20, 0
      %p61 = por %p59, %p60
      %p62 = scmp.ne.s32.totalorder %s51, %s54
      %p63 = scmp.eq.s32.totalorder %s25, 1
      %p64 = por %p62, %p63
      %p65 = scmp.ne.s32.totalorder %s54, %s55
      %p66 = scmp.eq.s32.totalorder %s25, 0
      %p67 = por %p65, %p66
      %p68 = scmp.ne.s32.totalorder %s54, %s55
      %p69 = scmp.eq.s32.totalorder %s26, 1
      %p70 = por %p68, %p69
      %p72 = scmp.ne.s32.totalorder %s55, %s71
      %p73 = scmp.eq.s32.totalorder %s26, 0
      %p74 = por %p72, %p73
      %s76 = sadd.s32 %s75, 1
      %p79 = scmp.eq.s32.totalorder %s20, 1
      %p80 = scmp.ne.s32.totalorder %s75, %s77
      %p81 = scmp.eq.s32.totalorder %s20, 0
      %p82 = por %p80, %p81
      %p83 = scmp.ne.s32.totalorder %s75, %s77
      %p84 = scmp.eq.s32.totalorder %s25, 1
      %p85 = por %p83, %p84
      %p86 = scmp.ne.s32.totalorder %s77, %s78
      %p87 = scmp.eq.s32.totalorder %s25, 0
      %p88 = por %p86, %p87
      %p89 = scmp.ne.s32.totalorder %s77, %s78
      %p90 = scmp.eq.s32.totalorder %s26, 1
      %p91 = por %p89, %p90
      %p93 = scmp.ne.s32.totalorder %s78, %s92
      %p94 = scmp.eq.s32.totalorder %s26, 0
      %p95 = por %p93, %p94
      %s97 = sadd.s32 %s96, 1
      %p100 = scmp.eq.s32.totalorder %s20, 1
      %p101 = scmp.ne.s32.totalorder %s96, %s98
      %p102 = scmp.eq.s32.totalorder %s20, 0
      %p103 = por %p101, %p102
      %p104 = scmp.ne.s32.totalorder %s96, %s98
      %p105 = scmp.eq.s32.totalorder %s25, 1
      %p106 = por %p104, %p105
      %p107 = scmp.ne.s32.totalorder %s98, %s99
      %p108 = scmp.eq.s32.totalorder %s25, 0
      %p109 = por %p107, %p108
      %p110 = scmp.ne.s32.totalorder %s98, %s99
      %p111 = scmp.eq.s32.totalorder %s26, 1
      %p112 = por %p110, %p111
      %p114 = scmp.ne.s32.totalorder %s99, %s113
      %p115 = scmp.eq.s32.totalorder %s26, 0
      %p116 = por %p114, %p115
      %s118 = sadd.s32 %s117, 1
      %p121 = scmp.eq.s32.totalorder %s20, 1
      %p122 = scmp.ne.s32.totalorder %s117, %s119
      %p123 = scmp.eq.s32.totalorder %s20, 0
      %p124 = por %p122, %p123
      %p125 = scmp.ne.s32.totalorder %s117, %s119
      %p126 = scmp.eq.s32.totalorder %s25, 1
      %p127 = por %p125, %p126
      %p128 = scmp.ne.s32.totalorder %s119, %s120
      %p129 = scmp.eq.s32.totalorder %s25, 0
      %p130 = por %p128, %p129
      %p131 = scmp.ne.s32.totalorder %s119, %s120
      %p132 = scmp.eq.s32.totalorder %s26, 1
      %p133 = por %p131, %p132
      %p135 = scmp.ne.s32.totalorder %s120, %s134
      %p136 = scmp.eq.s32.totalorder %s26, 0
      %p137 = por %p135, %p136
      %s139 = sadd.s32 %s138, 1
      %p142 = scmp.eq.s32.totalorder %s20, 1
      %p143 = scmp.ne.s32.totalorder %s138, %s140
      %p144 = scmp.eq.s32.totalorder %s20, 0
      %p145 = por %p143, %p144
      %p146 = scmp.ne.s32.totalorder %s138, %s140
      %p147 = scmp.eq.s32.totalorder %s25, 1
      %p148 = por %p146, %p147
      %p149 = scmp.ne.s32.totalorder %s140, %s141
      %p150 = scmp.eq.s32.totalorder %s25, 0
      %p151 = por %p149, %p150
      %p152 = scmp.ne.s32.totalorder %s140, %s141
      %p153 = scmp.eq.s32.totalorder %s26, 1
      %p154 = por %p152, %p153
      %p156 = scmp.ne.s32.totalorder %s141, %s155
      %p157 = scmp.eq.s32.totalorder %s26, 0
      %p158 = por %p156, %p157
      %s160 = sadd.s32 %s159, 1
      %p163 = scmp.eq.s32.totalorder %s20, 1
      %p164 = scmp.ne.s32.totalorder %s159, %s161
      %p165 = scmp.eq.s32.totalorder %s20, 0
      %p166 = por %p164, %p165
      %p167 = scmp.ne.s32.totalorder %s159, %s161
      %p168 = scmp.eq.s32.totalorder %s25, 1
      %p169 = por %p167, %p168
      %p170 = scmp.ne.s32.totalorder %s161, %s162
      %p171 = scmp.eq.s32.totalorder %s25, 0
      %p172 = por %p170, %p171
      %p173 = scmp.ne.s32.totalorder %s161, %s162
      %p174 = scmp.eq.s32.totalorder %s26, 1
      %p175 = por %p173, %p174
      %p177 = scmp.ne.s32.totalorder %s162, %s176
      %p178 = scmp.eq.s32.totalorder %s26, 0
      %p179 = por %p177, %p178
      %s180 = ssub.s32 %s20, %s27
      %p181 = scmp.eq.s32.totalorder %s180, 0
      %s183 = sadd.s32 %s182, 1
      %s184 = scalar_select %p181, %s182, %s183
      %p187 = pneg %p181
      %p188 = scmp.eq.s32.totalorder %s20, 1
      %p189 = por %p187, %p188
      %p190 = scmp.ne.s32.totalorder %s182, %s185
      %p191 = scmp.eq.s32.totalorder %s20, 0
      %p192 = por %p190, %p191
      %p193 = scmp.ne.s32.totalorder %s182, %s185
      %p194 = scmp.eq.s32.totalorder %s25, 1
      %p195 = por %p193, %p194
      %p196 = scmp.ne.s32.totalorder %s185, %s186
      %p197 = scmp.eq.s32.totalorder %s25, 0
      %p198 = por %p196, %p197
      %p199 = scmp.ne.s32.totalorder %s185, %s186
      %p200 = scmp.eq.s32.totalorder %s26, 1
      %p201 = por %p199, %p200
      %p203 = scmp.ne.s32.totalorder %s186, %s202
      %p204 = scmp.eq.s32.totalorder %s26, 0
      %p205 = por %p203, %p204
      %p206 = scmp.le.s32.totalorder 1, %s20
      %p207 = scmp.lt.s32.totalorder %s20, 3
      %p208 = pnand %p206, %p207
      %p209 = pneg %p208
      // Predicated region
      $region9: #{tpu_custom_call.1} parent=5 // pred_check
        _
      $region10: #{tpu_custom_call.1} parent=5 // pred_check_branch
        %211 = sbr.rel (%p208) target = $region12
      $region11: #{tpu_custom_call.1} parent=5 // pred_region
        %s212 = ssub.s32 %s20, 1
        // Predicated region
        $region13: #{tpu_custom_call.1} parent=11 // pred_check
          %p213 = pneg %p41
        $region14: #{tpu_custom_call.1} parent=11 // pred_check_branch
          %215 = sbr.rel (%p213) target = $region16
        $region15: #{tpu_custom_call.1} parent=11 // pred_region
          %s217 = ssub.s32 16, 16
          %218 = vsyncadd [#allocation6], %s217
          %221 = dma.hbm_to_smem %s0, 16, [#allocation3], [#allocation6]
        $region16: #{tpu_custom_call.1} parent=11 // pred_fallthru
          _
        // Predicated region
        $region17: #{tpu_custom_call.1} parent=11 // pred_check
          %p222 = pneg %p88
        $region18: #{tpu_custom_call.1} parent=11 // pred_check_branch
          %224 = sbr.rel (%p222) target = $region20
        $region19: #{tpu_custom_call.1} parent=11 // pred_region
          _
        $region20: #{tpu_custom_call.1} parent=11 // pred_fallthru
          _
        // Predicated region
        $region21: #{tpu_custom_call.1} parent=11 // pred_check
          %p225 = pneg %p109
        $region22: #{tpu_custom_call.1} parent=11 // pred_check_branch
          %227 = sbr.rel (%p225) target = $region24
        $region23: #{tpu_custom_call.1} parent=11 // pred_region
          _
        $region24: #{tpu_custom_call.1} parent=11 // pred_fallthru
          _
        // Predicated region
        $region25: #{tpu_custom_call.1} parent=11 // pred_check
          %p228 = pneg %p130
        $region26: #{tpu_custom_call.1} parent=11 // pred_check_branch
          %230 = sbr.rel (%p228) target = $region28
        $region27: #{tpu_custom_call.1} parent=11 // pred_region
          _
        $region28: #{tpu_custom_call.1} parent=11 // pred_fallthru
          _
        // Predicated region
        $region29: #{tpu_custom_call.1} parent=11 // pred_check
          %p231 = pneg %p151
        $region30: #{tpu_custom_call.1} parent=11 // pred_check_branch
          %233 = sbr.rel (%p231) target = $region32
        $region31: #{tpu_custom_call.1} parent=11 // pred_region
          _
        $region32: #{tpu_custom_call.1} parent=11 // pred_fallthru
          _
        // Predicated region
        $region33: #{tpu_custom_call.1} parent=11 // pred_check
          %p234 = pneg %p172
        $region34: #{tpu_custom_call.1} parent=11 // pred_check_branch
          %236 = sbr.rel (%p234) target = $region36
        $region35: #{tpu_custom_call.1} parent=11 // pred_region
          _
        $region36: #{tpu_custom_call.1} parent=11 // pred_fallthru
          _
      $region12: #{tpu_custom_call.1} parent=5 // pred_fallthru
        _
      %p237 = scmp.lt.s32.totalorder %s20, 2
      // Predicated region
      $region37: #{tpu_custom_call.1} parent=5 // pred_check
        %p238 = pneg %p237
      $region38: #{tpu_custom_call.1} parent=5 // pred_check_branch
        %240 = sbr.rel (%p238) target = $region40
      $region39: #{tpu_custom_call.1} parent=5 // pred_region
        // Predicated region
        $region41: #{tpu_custom_call.1} parent=39 // pred_check
          %p241 = pneg %p61
        $region42: #{tpu_custom_call.1} parent=39 // pred_check_branch
          %243 = sbr.rel (%p241) target = $region44
        $region43: #{tpu_custom_call.1} parent=39 // pred_region
          %s244 = sand.u32 %s51, 1
          %s245 = scalar_lea.sflag [#allocation4], %s244
          %s246 = sand.u32 %s51, 1
          %s247 = smul.addr %s246, 16
          %s248 = scalar_lea.vmem [#allocation7], %s247
          %s250 = ssub.s32 256, 256
          %251 = vsyncadd %s245, %s250
          %s252 = smul.addr %s20, 2
          %s253 = smul.addr %s252, 128
          %s254 = scalar_lea.hbm %s1, %s253
          %s256 = sshll.u32 %s248, 4
          %s257 = int_to_ptr.vmem [resolvable:$true] %s256
          %259 = dma.hbm_to_vmem [thread:$0]  %s254, 256, %s257, %s245
        $region44: #{tpu_custom_call.1} parent=39 // pred_fallthru
          _
      $region40: #{tpu_custom_call.1} parent=5 // pred_fallthru
        _
      %p260 = scmp.le.s32.totalorder 1, %s20
      %p261 = scmp.lt.s32.totalorder %s20, 3
      %p262 = pnand %p260, %p261
      %p263 = pneg %p262
      // Predicated region
      $region45: #{tpu_custom_call.1} parent=5 // pred_check
        _
      $region46: #{tpu_custom_call.1} parent=5 // pred_check_branch
        %265 = sbr.rel (%p262) target = $region48
      $region47: #{tpu_custom_call.1} parent=5 // pred_region
        %s266 = ssub.s32 %s20, 1
        // Predicated region
        $region49: #{tpu_custom_call.1} parent=47 // pred_check
          %p267 = pneg %p41
        $region50: #{tpu_custom_call.1} parent=47 // pred_check_branch
          %269 = sbr.rel (%p267) target = $region52
        $region51: #{tpu_custom_call.1} parent=47 // pred_region
          %270 = dma.done [#allocation6], 16
        $region52: #{tpu_custom_call.1} parent=47 // pred_fallthru
          _
        %s271 = sand.u32 %s54, 1
        %s272 = scalar_lea.sflag [#allocation4], %s271
        %s273 = sand.u32 %s54, 1
        %s274 = smul.addr %s273, 16
        %s275 = scalar_lea.vmem [#allocation7], %s274
        // Predicated region
        $region53: #{tpu_custom_call.1} parent=47 // pred_check
          %p276 = pneg %p67
        $region54: #{tpu_custom_call.1} parent=47 // pred_check_branch
          %278 = sbr.rel (%p276) target = $region56
        $region55: #{tpu_custom_call.1} parent=47 // pred_region
          %279 = dma.done %s272, 256
        $region56: #{tpu_custom_call.1} parent=47 // pred_fallthru
          _
        %280 = sfence
        %p281 = pneg %p41
        %p282 = pneg %p38
        %s283 = sand.u32 %s54, 1
        %s284 = scalar_lea.sflag [#allocation4], %s283
        %s285 = sand.u32 %s54, 1
        %s286 = smul.addr %s285, 16
        %s287 = scalar_lea.vmem [#allocation7], %s286
        %p288 = pneg %p67
        %p289 = pneg %p64
        %p290 = pneg %p88
        %p291 = pneg %p85
        %p292 = pneg %p109
        %p293 = pneg %p106
        %p294 = pneg %p130
        %p295 = pneg %p127
        %p296 = pneg %p151
        %p297 = pneg %p148
        %p298 = pneg %p172
        %p299 = pneg %p169
        %p300 = pneg %p198
        %p301 = pneg %p195
        %s302 = sand.u32 %s185, 1
        %s303 = scalar_lea.sflag [#allocation5], %s302
        %s304 = sand.u32 %s185, 1
        %s305 = smul.addr %s304, 16
        %s306 = scalar_lea.vmem [#allocation8], %s305
        %s308 = sld [smem:[#allocation3 + %s25]]
        %s309 = smul.f32 %s308, %s308
        %v310 = vstv %s309
        %v311 = vrcp.pop %v310
        %s312 = vtos %v311
        %v313 = vld [vmem:[%s275] sm:$0xff]
        %v314 = vld [vmem:[%s275 + $0x8] sm:$0xff]
        %v315 = vlaneseq
        %v316 = vand.u32 %v315, 127
        %v317 = vadd.s32 %v316, 128
        %v318 = vand.u32 %v316, 15
        %v319 = vand.u32 %v317, 15
        %vm320 = vcmp.ge.s32.totalorder %v318, 1
        %vm321 = vcmp.ge.s32.totalorder %v319, 1
        %vm322 = vcmp.le.s32.totalorder %v318, 14
        %vm323 = vcmp.le.s32.totalorder %v319, 14
        %326 = vrot.lane.b32.xlu0 %v313, 17
        %v327 = vpop.permute.xlu0 %326
        %328 = vrot.lane.b32.xlu0 %v314, 17
        %v329 = vpop.permute.xlu0 %328
        %vm330 = vcmask 138240
        %v331 = vsel %vm330, %v327, %v329
        %v334 = vsel %vm330, 0.0, %v327
        %v335 = vsel %vm320, %v334, 0.0
        %v336 = vsel %vm321, %v331, 0.0
        %337 = vst [vmem:[#allocation2] sm:$0xff] %v335
        %338 = vst [vmem:[#allocation2 + $0x8] sm:$0xff] %v336
        %339 = vrot.lane.b32.xlu0 %v313, 16
        %v340 = vpop.permute.xlu0 %339
        %341 = vrot.lane.b32.xlu0 %v314, 16
        %v342 = vpop.permute.xlu0 %341
        %vm343 = vcmask 130048
        %v344 = vsel %vm343, %v340, %v342
        %v347 = vsel %vm343, 0.0, %v340
        %348 = vst [vmem:[#allocation2 + $0x10] sm:$0xff] %v347
        %349 = vst [vmem:[#allocation2 + $0x18] sm:$0xff] %v344
        %350 = vrot.lane.b32.xlu0 %v313, 15
        %v351 = vpop.permute.xlu0 %350
        %352 = vrot.lane.b32.xlu0 %v314, 15
        %v353 = vpop.permute.xlu0 %352
        %vm354 = vcmask 121856
        %v355 = vsel %vm354, %v351, %v353
        %v358 = vsel %vm354, 0.0, %v351
        %v359 = vsel %vm322, %v358, 0.0
        %v360 = vsel %vm323, %v355, 0.0
        %361 = vst [vmem:[#allocation2 + $0x20] sm:$0xff] %v359
        %362 = vst [vmem:[#allocation2 + $0x28] sm:$0xff] %v360
        %363 = vrot.lane.b32.xlu0 %v313, 1
        %v364 = vpop.permute.xlu0 %363
        %365 = vrot.lane.b32.xlu0 %v314, 1
        %v366 = vpop.permute.xlu0 %365
        %vm367 = vcmask 7168
        %v368 = vsel %vm367, %v364, %v366
        %v371 = vsel %vm367, 0.0, %v364
        %v372 = vsel %vm320, %v371, 0.0
        %v373 = vsel %vm321, %v368, 0.0
        %374 = vst [vmem:[#allocation2 + $0x30] sm:$0xff] %v372
        %375 = vst [vmem:[#allocation2 + $0x38] sm:$0xff] %v373
        %376 = vst [vmem:[#allocation2 + $0x40] sm:$0xff] %v313
        %377 = vst [vmem:[#allocation2 + $0x48] sm:$0xff] %v314
        %378 = vrot.lane.b32.xlu0 %v313, 127
        %v379 = vpop.permute.xlu0 %378
        %380 = vrot.lane.b32.xlu0 %v314, 127
        %v381 = vpop.permute.xlu0 %380
        %vm382 = vcmask 1039360
        %v383 = vsel %vm382, %v379, %v381
        %v386 = vsel %vm382, %v381, 0.0
        %v387 = vsel %vm322, %v383, 0.0
        %v388 = vsel %vm323, %v386, 0.0
        %389 = vst [vmem:[#allocation2 + $0x50] sm:$0xff] %v387
        %390 = vst [vmem:[#allocation2 + $0x58] sm:$0xff] %v388
        %391 = vrot.lane.b32.xlu0 %v313, 113
        %v392 = vpop.permute.xlu0 %391
        %393 = vrot.lane.b32.xlu0 %v314, 113
        %v394 = vpop.permute.xlu0 %393
        %vm395 = vcmask 924672
        %v396 = vsel %vm395, %v392, %v394
        %v399 = vsel %vm395, %v394, 0.0
        %v400 = vsel %vm320, %v396, 0.0
        %v401 = vsel %vm321, %v399, 0.0
        %402 = vst [vmem:[#allocation2 + $0x60] sm:$0xff] %v400
        %403 = vst [vmem:[#allocation2 + $0x68] sm:$0xff] %v401
        %404 = vrot.lane.b32.xlu0 %v313, 112
        %v405 = vpop.permute.xlu0 %404
        %406 = vrot.lane.b32.xlu0 %v314, 112
        %v407 = vpop.permute.xlu0 %406
        %vm408 = vcmask 916480
        %v409 = vsel %vm408, %v405, %v407
        %v412 = vsel %vm408, %v407, 0.0
        %413 = vst [vmem:[#allocation2 + $0x70] sm:$0xff] %v409
        %414 = vst [vmem:[#allocation2 + $0x78] sm:$0xff] %v412
        %415 = vrot.lane.b32.xlu0 %v313, 111
        %v416 = vpop.permute.xlu0 %415
        %417 = vrot.lane.b32.xlu0 %v314, 111
        %v418 = vpop.permute.xlu0 %417
        %vm419 = vcmask 908288
        %v420 = vsel %vm419, %v416, %v418
        %v423 = vsel %vm419, %v418, 0.0
        %v424 = vsel %vm322, %v420, 0.0
        %v425 = vsel %vm323, %v423, 0.0
        %426 = vst [vmem:[#allocation2 + $0x80] sm:$0xff] %v424
        %427 = vst [vmem:[#allocation2 + $0x88] sm:$0xff] %v425
        %v428 = vld [vmem:[%s2] sm:$0xff]
        %v429 = vpack.c.bf16 %v428, %v428
        %v430 = vld [vmem:[#allocation2] sm:$0xff]
        %v431 = vld [vmem:[#allocation2 + $0x8] sm:$0xff]
        %v432 = vld [vmem:[#allocation2 + $0x10] sm:$0xff]
        %v433 = vld [vmem:[#allocation2 + $0x18] sm:$0xff]
        %v434 = vld [vmem:[#allocation2 + $0x20] sm:$0xff]
        %v435 = vld [vmem:[#allocation2 + $0x28] sm:$0xff]
        %v436 = vld [vmem:[#allocation2 + $0x30] sm:$0xff]
        %v437 = vld [vmem:[#allocation2 + $0x38] sm:$0xff]
        %v438 = vld [vmem:[#allocation2 + $0x40] sm:$0xff]
        %v439 = vld [vmem:[#allocation2 + $0x48] sm:$0xff]
        %v440 = vld [vmem:[#allocation2 + $0x50] sm:$0xff]
        %v441 = vld [vmem:[#allocation2 + $0x58] sm:$0xff]
        %v442 = vld [vmem:[#allocation2 + $0x60] sm:$0xff]
        %v443 = vld [vmem:[#allocation2 + $0x68] sm:$0xff]
        %v444 = vld [vmem:[#allocation2 + $0x70] sm:$0xff]
        %v445 = vld [vmem:[#allocation2 + $0x78] sm:$0xff]
        %v446 = vld [vmem:[#allocation2 + $0x80] sm:$0xff]
        %v447 = vld [vmem:[#allocation2 + $0x88] sm:$0xff]
        %v448 = vpack.c.bf16 %v432, %v430
        %v449 = vpack.c.bf16 %v433, %v431
        %v450 = vpack.c.bf16 %v436, %v434
        %v451 = vpack.c.bf16 %v437, %v435
        %v452 = vpack.c.bf16 %v440, %v438
        %v453 = vpack.c.bf16 %v441, %v439
        %v454 = vpack.c.bf16 %v444, %v442
        %v455 = vpack.c.bf16 %v445, %v443
        %v456 = vpack.c.bf16 %v446, %v446
        %v457 = vpack.c.bf16 %v447, %v447
        %v458 = vld [vmem:[%s3] sm:$0xff]
        %460 = vset.pattern.permute.xlu0 0
        %461 = vperm.xlu0 %460, %v458
        %v462 = vpop.permute.xlu0 %461
        %vm464 = vcmask 588800
        %v466 = vsel %vm464, %v429, 0
        %vm468 = vcmask 1043456
        %v470 = vsel %vm468, %v456, 0
        %v473 = vsel %vm468, %v457, 0
        %475 = vmatprep.subr.bf16.mxu0 0
        %476 = vmatpush1.bf16.msra.mxu0 0
        %477 = vmatprep.subr.bf16.mxu0 0
        %478 = vmatpush1.bf16.msra.mxu0 0
        %479 = vmatprep.subr.bf16.mxu0 0
        %480 = vmatpush1.bf16.msra.mxu0 0
        %481 = vmatprep.subr.bf16.mxu0 %v473
        %482 = vmatpush1.bf16.msra.mxu0 %v470
        %483 = vmatprep.subr.bf16.mxu0 %v455
        %484 = vmatpush1.bf16.msra.mxu0 %v454
        %485 = vmatprep.subr.bf16.mxu0 %v453
        %486 = vmatpush1.bf16.msra.mxu0 %v452
        %487 = vmatprep.subr.bf16.mxu0 %v451
        %488 = vmatpush1.bf16.msra.mxu0 %v450
        %489 = vmatprep.subr.bf16.mxu0 %v449
        %490 = vmatpush1.bf16.msra.mxu0 %v448
        %491 = vmatprep.subr.bf16.mxu0 0
        %492 = vmatpush2.bf16.msra.mxu0 0
        %493 = vmatprep.subr.bf16.mxu0 0
        %494 = vmatpush2.bf16.msra.mxu0 0
        %495 = vmatprep.subr.bf16.mxu0 0
        %496 = vmatpush2.bf16.msra.mxu0 0
        %497 = vmatprep.subr.bf16.mxu0 0
        %498 = vmatpush2.bf16.msra.mxu0 0
        %499 = vmatprep.subr.bf16.mxu0 0
        %500 = vmatpush2.bf16.msra.mxu0 0
        %501 = vmatprep.subr.bf16.mxu0 0
        %502 = vmatpush2.bf16.msra.mxu0 0
        %503 = vmatprep.subr.bf16.mxu0 0
        %504 = vmatpush2.bf16.msra.mxu0 0
        %505 = vmatprep.subr.bf16.mxu0 0
        %506 = vmatpush2.bf16.msra.mxu0 0
        %507 = vmatprep.mubr.bf16.mxu0 0
        %508 = vmatmul.mubr.bf16.gmra.mxu0 %v466
        %v509 = vpop.f32.mrf.mxu0
        %v510 = vadd.f32 %v462, %v509
        %v511 = vpop.f32.mrf.mxu0
        %v512 = vadd.f32 %v462, %v511
        %v513 = vpop.f32.mrf.mxu0
        %v514 = vpop.f32.mrf.mxu0
        %515 = vdwg.mxu0
        %v516 = vmax.f32 %v510, 0.0
        %v517 = vmax.f32 %v512, 0.0
        %520 = vrot.lane.b32.xlu0 %v516, 17
        %v521 = vpop.permute.xlu0 %520
        %522 = vrot.lane.b32.xlu0 %v517, 17
        %v523 = vpop.permute.xlu0 %522
        %v524 = vsel %vm330, %v521, %v523
        %v527 = vsel %vm330, 0.0, %v521
        %v528 = vsel %vm320, %v527, 0.0
        %v529 = vsel %vm321, %v524, 0.0
        %530 = vst [vmem:[#allocation2] sm:$0xff] %v528
        %531 = vst [vmem:[#allocation2 + $0x8] sm:$0xff] %v529
        %532 = vrot.lane.b32.xlu0 %v516, 16
        %v533 = vpop.permute.xlu0 %532
        %534 = vrot.lane.b32.xlu0 %v517, 16
        %v535 = vpop.permute.xlu0 %534
        %v536 = vsel %vm343, %v533, %v535
        %v539 = vsel %vm343, 0.0, %v533
        %540 = vst [vmem:[#allocation2 + $0x10] sm:$0xff] %v539
        %541 = vst [vmem:[#allocation2 + $0x18] sm:$0xff] %v536
        %542 = vrot.lane.b32.xlu0 %v516, 15
        %v543 = vpop.permute.xlu0 %542
        %544 = vrot.lane.b32.xlu0 %v517, 15
        %v545 = vpop.permute.xlu0 %544
        %v546 = vsel %vm354, %v543, %v545
        %v549 = vsel %vm354, 0.0, %v543
        %v550 = vsel %vm322, %v549, 0.0
        %v551 = vsel %vm323, %v546, 0.0
        %552 = vst [vmem:[#allocation2 + $0x20] sm:$0xff] %v550
        %553 = vst [vmem:[#allocation2 + $0x28] sm:$0xff] %v551
        %554 = vrot.lane.b32.xlu0 %v516, 1
        %v555 = vpop.permute.xlu0 %554
        %556 = vrot.lane.b32.xlu0 %v517, 1
        %v557 = vpop.permute.xlu0 %556
        %v558 = vsel %vm367, %v555, %v557
        %v561 = vsel %vm367, 0.0, %v555
        %v562 = vsel %vm320, %v561, 0.0
        %v563 = vsel %vm321, %v558, 0.0
        %564 = vst [vmem:[#allocation2 + $0x30] sm:$0xff] %v562
        %565 = vst [vmem:[#allocation2 + $0x38] sm:$0xff] %v563
        %566 = vst [vmem:[#allocation2 + $0x40] sm:$0xff] %v516
        %567 = vst [vmem:[#allocation2 + $0x48] sm:$0xff] %v517
        %568 = vrot.lane.b32.xlu0 %v516, 127
        %v569 = vpop.permute.xlu0 %568
        %570 = vrot.lane.b32.xlu0 %v517, 127
        %v571 = vpop.permute.xlu0 %570
        %v572 = vsel %vm382, %v569, %v571
        %v575 = vsel %vm382, %v571, 0.0
        %v576 = vsel %vm322, %v572, 0.0
        %v577 = vsel %vm323, %v575, 0.0
        %578 = vst [vmem:[#allocation2 + $0x50] sm:$0xff] %v576
        %579 = vst [vmem:[#allocation2 + $0x58] sm:$0xff] %v577
        %580 = vrot.lane.b32.xlu0 %v516, 113
        %v581 = vpop.permute.xlu0 %580
        %582 = vrot.lane.b32.xlu0 %v517, 113
        %v583 = vpop.permute.xlu0 %582
        %v584 = vsel %vm395, %v581, %v583
        %v587 = vsel %vm395, %v583, 0.0
        %v588 = vsel %vm320, %v584, 0.0
        %v589 = vsel %vm321, %v587, 0.0
        %590 = vst [vmem:[#allocation2 + $0x60] sm:$0xff] %v588
        %591 = vst [vmem:[#allocation2 + $0x68] sm:$0xff] %v589
        %592 = vrot.lane.b32.xlu0 %v516, 112
        %v593 = vpop.permute.xlu0 %592
        %594 = vrot.lane.b32.xlu0 %v517, 112
        %v595 = vpop.permute.xlu0 %594
        %v596 = vsel %vm408, %v593, %v595
        %v599 = vsel %vm408, %v595, 0.0
        %600 = vst [vmem:[#allocation2 + $0x70] sm:$0xff] %v596
        %601 = vst [vmem:[#allocation2 + $0x78] sm:$0xff] %v599
        %602 = vrot.lane.b32.xlu0 %v516, 111
        %v603 = vpop.permute.xlu0 %602
        %604 = vrot.lane.b32.xlu0 %v517, 111
        %v605 = vpop.permute.xlu0 %604
        %v606 = vsel %vm419, %v603, %v605
        %v609 = vsel %vm419, %v605, 0.0
        %v610 = vsel %vm322, %v606, 0.0
        %v611 = vsel %vm323, %v609, 0.0
        %612 = vst [vmem:[#allocation2 + $0x80] sm:$0xff] %v610
        %613 = vst [vmem:[#allocation2 + $0x88] sm:$0xff] %v611
        %v614 = vld [vmem:[%s4] sm:$0xff]
        %v615 = vpack.c.bf16 %v614, %v614
        %v616 = vld [vmem:[#allocation2] sm:$0xff]
        %v617 = vld [vmem:[#allocation2 + $0x8] sm:$0xff]
        %v618 = vld [vmem:[#allocation2 + $0x10] sm:$0xff]
        %v619 = vld [vmem:[#allocation2 + $0x18] sm:$0xff]
        %v620 = vld [vmem:[#allocation2 + $0x20] sm:$0xff]
        %v621 = vld [vmem:[#allocation2 + $0x28] sm:$0xff]
        %v622 = vld [vmem:[#allocation2 + $0x30] sm:$0xff]
        %v623 = vld [vmem:[#allocation2 + $0x38] sm:$0xff]
        %v624 = vld [vmem:[#allocation2 + $0x40] sm:$0xff]
        %v625 = vld [vmem:[#allocation2 + $0x48] sm:$0xff]
        %v626 = vld [vmem:[#allocation2 + $0x50] sm:$0xff]
        %v627 = vld [vmem:[#allocation2 + $0x58] sm:$0xff]
        %v628 = vld [vmem:[#allocation2 + $0x60] sm:$0xff]
        %v629 = vld [vmem:[#allocation2 + $0x68] sm:$0xff]
        %v630 = vld [vmem:[#allocation2 + $0x70] sm:$0xff]
        %v631 = vld [vmem:[#allocation2 + $0x78] sm:$0xff]
        %v632 = vld [vmem:[#allocation2 + $0x80] sm:$0xff]
        %v633 = vld [vmem:[#allocation2 + $0x88] sm:$0xff]
        %v634 = vpack.c.bf16 %v618, %v616
        %v635 = vpack.c.bf16 %v619, %v617
        %v636 = vpack.c.bf16 %v622, %v620
        %v637 = vpack.c.bf16 %v623, %v621
        %v638 = vpack.c.bf16 %v626, %v624
        %v639 = vpack.c.bf16 %v627, %v625
        %v640 = vpack.c.bf16 %v630, %v628
        %v641 = vpack.c.bf16 %v631, %v629
        %v642 = vpack.c.bf16 %v632, %v632
        %v643 = vpack.c.bf16 %v633, %v633
        %v644 = vld [vmem:[%s5] sm:$0xff]
        %646 = vset.pattern.permute.xlu0 0
        %647 = vperm.xlu0 %646, %v644
        %v648 = vpop.permute.xlu0 %647
        %v651 = vsel %vm464, %v615, 0
        %v654 = vsel %vm468, %v642, 0
        %v657 = vsel %vm468, %v643, 0
        %659 = vmatprep.subr.bf16.mxu0 0
        %660 = vmatpush1.bf16.msra.mxu0 0
        %661 = vmatprep.subr.bf16.mxu0 0
        %662 = vmatpush1.bf16.msra.mxu0 0
        %663 = vmatprep.subr.bf16.mxu0 0
        %664 = vmatpush1.bf16.msra.mxu0 0
        %665 = vmatprep.subr.bf16.mxu0 %v657
        %666 = vmatpush1.bf16.msra.mxu0 %v654
        %667 = vmatprep.subr.bf16.mxu0 %v641
        %668 = vmatpush1.bf16.msra.mxu0 %v640
        %669 = vmatprep.subr.bf16.mxu0 %v639
        %670 = vmatpush1.bf16.msra.mxu0 %v638
        %671 = vmatprep.subr.bf16.mxu0 %v637
        %672 = vmatpush1.bf16.msra.mxu0 %v636
        %673 = vmatprep.subr.bf16.mxu0 %v635
        %674 = vmatpush1.bf16.msra.mxu0 %v634
        %675 = vmatprep.subr.bf16.mxu0 0
        %676 = vmatpush2.bf16.msra.mxu0 0
        %677 = vmatprep.subr.bf16.mxu0 0
        %678 = vmatpush2.bf16.msra.mxu0 0
        %679 = vmatprep.subr.bf16.mxu0 0
        %680 = vmatpush2.bf16.msra.mxu0 0
        %681 = vmatprep.subr.bf16.mxu0 0
        %682 = vmatpush2.bf16.msra.mxu0 0
        %683 = vmatprep.subr.bf16.mxu0 0
        %684 = vmatpush2.bf16.msra.mxu0 0
        %685 = vmatprep.subr.bf16.mxu0 0
        %686 = vmatpush2.bf16.msra.mxu0 0
        %687 = vmatprep.subr.bf16.mxu0 0
        %688 = vmatpush2.bf16.msra.mxu0 0
        %689 = vmatprep.subr.bf16.mxu0 0
        %690 = vmatpush2.bf16.msra.mxu0 0
        %691 = vmatprep.mubr.bf16.mxu0 0
        %692 = vmatmul.mubr.bf16.gmra.mxu0 %v651
        %v693 = vpop.f32.mrf.mxu0
        %v694 = vadd.f32 %v648, %v693
        %v695 = vpop.f32.mrf.mxu0
        %v696 = vadd.f32 %v648, %v695
        %v697 = vpop.f32.mrf.mxu0
        %v698 = vpop.f32.mrf.mxu0
        %699 = vdwg.mxu0
        %v700 = vld [vmem:[%s6] sm:$0xff]
        %vm701 = vcmask 64512
        %v703 = vsel %vm701, %v700, 0
        %705 = vmatprep.subr.mxu0 0.0
        %706 = vmatpush1.msra.mxu0 0.0
        %707 = vmatprep.subr.mxu0 0.0
        %708 = vmatpush1.msra.mxu0 0.0
        %709 = vmatprep.subr.mxu0 0.0
        %710 = vmatpush1.msra.mxu0 0.0
        %711 = vmatprep.subr.mxu0 0.0
        %712 = vmatpush1.msra.mxu0 0.0
        %713 = vmatprep.subr.mxu0 0.0
        %714 = vmatpush1.msra.mxu0 0.0
        %715 = vmatprep.subr.mxu0 0.0
        %716 = vmatpush1.msra.mxu0 0.0
        %717 = vmatprep.subr.mxu0 0.0
        %718 = vmatpush1.msra.mxu0 0.0
        %719 = vmatprep.subr.mxu0 0.0
        %720 = vmatpush1.msra.mxu0 0.0
        %721 = vmatprep.subr.mxu0 0.0
        %722 = vmatpush1.msra.mxu0 0.0
        %723 = vmatprep.subr.mxu0 0.0
        %724 = vmatpush1.msra.mxu0 0.0
        %725 = vmatprep.subr.mxu0 0.0
        %726 = vmatpush1.msra.mxu0 0.0
        %727 = vmatprep.subr.mxu0 0.0
        %728 = vmatpush1.msra.mxu0 0.0
        %729 = vmatprep.subr.mxu0 0.0
        %730 = vmatpush1.msra.mxu0 0.0
        %731 = vmatprep.subr.mxu0 0.0
        %732 = vmatpush1.msra.mxu0 0.0
        %733 = vmatprep.subr.mxu0 0.0
        %734 = vmatpush1.msra.mxu0 0.0
        %735 = vmatprep.subr.mxu0 %v314
        %736 = vmatpush1.msra.mxu0 %v313
        %737 = vmatprep.subr.mxu0 0.0
        %738 = vmatpush2.msra.mxu0 0.0
        %739 = vmatprep.subr.mxu0 0.0
        %740 = vmatpush2.msra.mxu0 0.0
        %741 = vmatprep.subr.mxu0 0.0
        %742 = vmatpush2.msra.mxu0 0.0
        %743 = vmatprep.subr.mxu0 0.0
        %744 = vmatpush2.msra.mxu0 0.0
        %745 = vmatprep.subr.mxu0 0.0
        %746 = vmatpush2.msra.mxu0 0.0
        %747 = vmatprep.subr.mxu0 0.0
        %748 = vmatpush2.msra.mxu0 0.0
        %749 = vmatprep.subr.mxu0 0.0
        %750 = vmatpush2.msra.mxu0 0.0
        %751 = vmatprep.subr.mxu0 0.0
        %752 = vmatpush2.msra.mxu0 0.0
        %753 = vmatprep.subr.mxu0 0.0
        %754 = vmatpush2.msra.mxu0 0.0
        %755 = vmatprep.subr.mxu0 0.0
        %756 = vmatpush2.msra.mxu0 0.0
        %757 = vmatprep.subr.mxu0 0.0
        %758 = vmatpush2.msra.mxu0 0.0
        %759 = vmatprep.subr.mxu0 0.0
        %760 = vmatpush2.msra.mxu0 0.0
        %761 = vmatprep.subr.mxu0 0.0
        %762 = vmatpush2.msra.mxu0 0.0
        %763 = vmatprep.subr.mxu0 0.0
        %764 = vmatpush2.msra.mxu0 0.0
        %765 = vmatprep.subr.mxu0 0.0
        %766 = vmatpush2.msra.mxu0 0.0
        %767 = vmatprep.subr.mxu0 0.0
        %768 = vmatpush2.msra.mxu0 0.0
        %769 = vmatprep.mubr.f32.mxu0 0.0
        %770 = vmatmul.mubr.f32.gmra.mxu0 %v703
        %v771 = vpop.f32.mrf.mxu0
        %v772 = vadd.f32 0.0, %v771
        %v773 = vpop.f32.mrf.mxu0
        %v774 = vadd.f32 0.0, %v773
        %775 = vdwg.mxu0
        %v776 = vstv %s312
        %v777 = vmul.f32 %v776, %v772
        %v778 = vmul.f32 %v776, %v774
        %v779 = vsub.f32 %v313, %v694
        %v780 = vsub.f32 %v314, %v696
        %v781 = vsub.f32 %v779, %v777
        %v782 = vsub.f32 %v780, %v778
        %783 = vst [vmem:[%s306] sm:$0xff] %v781
        %784 = vst [vmem:[%s306 + $0x8] sm:$0xff] %v782
        %s785 = sand.u32 %s185, 1
        %s786 = scalar_lea.sflag [#allocation5], %s785
        %s787 = sand.u32 %s185, 1
        %s788 = smul.addr %s787, 16
        %s789 = scalar_lea.vmem [#allocation8], %s788
        // Predicated region
        $region57: #{tpu_custom_call.1} parent=47 // pred_check
          %p790 = pneg %p195
        $region58: #{tpu_custom_call.1} parent=47 // pred_check_branch
          %792 = sbr.rel (%p790) target = $region60
        $region59: #{tpu_custom_call.1} parent=47 // pred_region
          %s794 = ssub.s32 256, 256
          %795 = vsyncadd %s786, %s794
          %s796 = smul.addr %s25, 2
          %s797 = smul.addr %s796, 128
          %s798 = scalar_lea.hbm %s7, %s797
          %s800 = sshll.u32 %s789, 4
          %s801 = int_to_ptr.vmem [resolvable:$true] %s800
          %803 = dma.vmem_to_hbm [thread:$0]  %s801, 256, %s798, %s786
        $region60: #{tpu_custom_call.1} parent=47 // pred_fallthru
          _
      $region48: #{tpu_custom_call.1} parent=5 // pred_fallthru
        _
      %p804 = scmp.le.s32.totalorder 2, %s20
      // Predicated region
      $region61: #{tpu_custom_call.1} parent=5 // pred_check
        %p805 = pneg %p804
      $region62: #{tpu_custom_call.1} parent=5 // pred_check_branch
        %807 = sbr.rel (%p805) target = $region64
      $region63: #{tpu_custom_call.1} parent=5 // pred_region
        %s808 = ssub.s32 %s20, 2
        // Predicated region
        $region65: #{tpu_custom_call.1} parent=63 // pred_check
          %p809 = pneg %p201
        $region66: #{tpu_custom_call.1} parent=63 // pred_check_branch
          %811 = sbr.rel (%p809) target = $region68
        $region67: #{tpu_custom_call.1} parent=63 // pred_region
          %s812 = sand.u32 %s186, 1
          %s813 = scalar_lea.sflag [#allocation5], %s812
          %s814 = sand.u32 %s186, 1
          %s815 = smul.addr %s814, 16
          %s816 = scalar_lea.vmem [#allocation8], %s815
          %817 = dma.done %s813, 256
        $region68: #{tpu_custom_call.1} parent=63 // pred_fallthru
          _
      $region64: #{tpu_custom_call.1} parent=5 // pred_fallthru
        _
    $region6: #{tpu_custom_call.1} parent=1 // loop_footer
      %s24 = sadd.s32 1, %s20
    $region7: #{tpu_custom_call.1} parent=1 // loop_footer_branch
      %19 = sbr.rel target = $region3
    $region8: #{tpu_custom_call.1} parent=1 // loop_exit
      _
    %818 = vsyncpa [#allocation4], 1
    %s819 = scalar_lea.sflag [#allocation4], 1
    %820 = vsyncpa %s819, 1
    %821 = vsyncpa [#allocation5], 1
    %s822 = scalar_lea.sflag [#allocation5], 1
    %823 = vsyncpa %s822, 1
    %824 = vsyncpa [#allocation6], 1
    %s825 = scalar_lea.sflag [#allocation6], 1
    %826 = vsyncpa %s825, 1

</llo_original>
